<compile_context>
chip_gen: v5e
topology: v5e:2x2
jax: 0.10.0
libtpu: 0.0.40
codegen_flags: <defaults>
</compile_context>

<pallas_src>
import jax
import jax.numpy as jnp
from jax.experimental import pallas as pl
from jax.experimental.pallas import tpu as pltpu


# ---------------------------------------------------------------------------
# Kernel body: relu6(x + 3) / 6  ==  clip(x + 3, 0, 6) * (1/6)
# ---------------------------------------------------------------------------
def _h_sigmoid_kernel(x_ref, o_ref):
    x = x_ref[...]
    o_ref[...] = (jnp.clip(x + 3.0, 0.0, 6.0) * (1.0 / 6.0)).astype(o_ref.dtype)


_LANE = 128
_LANE_CHOICES = (8192, 4096, 2048, 1024, 512, 256, 128)


def _cdiv(a: int, b: int) -> int:
    return -(-a // b)


def _round_up(a: int, b: int) -> int:
    return _cdiv(a, b) * b


def _vmem_capacity_bytes() -> int:
    """Best-effort per-core VMEM query; conservative (v7x, 64 MiB) fallback."""
    try:
        info = pltpu.get_tpu_info()
        cap = int(getattr(info, "vmem_capacity_bytes", 0) or 0)
        if cap > 0:
            return cap
    except Exception:
        pass
    return 64 * 1024 * 1024


def _generation_block_budget():
    """Return (target block bytes, vmem_limit_bytes) for this TPU generation."""
    vmem_cap = _vmem_capacity_bytes()
    if vmem_cap >= 96 * 1024 * 1024:          # v5e / v6e (128 MiB VMEM)
        return 16 * 1024 * 1024, 80 * 1024 * 1024
    # v7x (64 MiB VMEM) or unknown: peak pipelined VMEM ~ 2*(in+out)*8 MiB = 32 MiB
    return 8 * 1024 * 1024, 48 * 1024 * 1024


def _choose_layout(size: int, sublane: int):
    """Pick a lane-dense 2-D slab (lanes, rows, padded_size).

    Prefers lane widths that divide `size` exactly (no pad / no slice copy);
    the rare ragged fallback pads only to `lanes` granularity.
    """
    # 1) exact divisor with a healthy number of sublane rows.
    for lanes in _LANE_CHOICES:
        if size % lanes == 0 and size // lanes >= sublane:
            return lanes, size // lanes, size
    # 2) exact divisor, few rows (tiny tensor -> single full-array block).
    for lanes in _LANE_CHOICES:
        if size % lanes == 0:
            return lanes, size // lanes, size
    # 3) ragged case (size not a multiple of 128): pad to the lane width only.
    lanes = _LANE
    for cand in _LANE_CHOICES:
        if size >= sublane * cand:
            lanes = cand
            break
    padded = _round_up(size, lanes)
    return lanes, padded // lanes, padded


def h_sigmoid(x: jax.Array) -> jax.Array:
    """Elementwise hard-sigmoid. Accepts any shape (e.g. NCHW)."""
    orig_shape = x.shape
    dtype = x.dtype
    size = int(x.size)
    if size == 0:
        return x

    dtype_bytes = jnp.dtype(dtype).itemsize
    sublane = max(8, 32 // dtype_bytes)       # 8 for f32, 16 for bf16, 32 for int8

    lanes, rows, padded = _choose_layout(size, sublane)

    flat = x.reshape(-1)
    if padded != size:
        # TODO(synk): ragged tail still costs a pad + slice HBM copy; only hit
        # when size is not a multiple of 128.
        flat = jnp.pad(flat, (0, padded - size))
    x2d = flat.reshape(rows, lanes)

    block_bytes, vmem_limit = _generation_block_budget()
    max_block_rows = max(1, block_bytes // (lanes * dtype_bytes))

    if max_block_rows >= rows:
        tr = rows                              # whole array in a single block
    else:
        tr = max(sublane, (max_block_rows // sublane) * sublane)

    # Give v7x's second TensorCore half of any non-tiny tensor (free elsewhere).
    if tr == rows and rows >= 2 * sublane:
        tr = _round_up(_cdiv(rows, 2), sublane)

    nblocks = _cdiv(rows, tr)
    if nblocks > 1 and nblocks % 2 == 1:
        # Best-effort even grid count for 2-TC load balance on v7x.
        tr_even = max(sublane, _round_up(_cdiv(rows, nblocks + 1), sublane))
        if tr_even < rows:
            tr = tr_even
            nblocks = _cdiv(rows, tr)

    grid = (nblocks,)

    out2d = pl.pallas_call(
        _h_sigmoid_kernel,
        out_shape=jax.ShapeDtypeStruct((rows, lanes), dtype),
        grid_spec=pltpu.PrefetchScalarGridSpec(
            num_scalar_prefetch=0,
            grid=grid,
            in_specs=[pl.BlockSpec((tr, lanes), lambda i: (i, 0))],
            out_specs=pl.BlockSpec((tr, lanes), lambda i: (i, 0)),
        ),
        compiler_params=pltpu.CompilerParams(
            dimension_semantics=("parallel",),
            vmem_limit_bytes=vmem_limit,
        ),
    )(x2d)

    out_flat = out2d.reshape(-1)
    if padded != size:
        out_flat = out_flat[:size]
    return out_flat.reshape(orig_shape)


def _h_sigmoid_ref(x):
    return jnp.clip(x + 3.0, 0.0, 6.0) / 6.0


if __name__ == "__main__":
    key = jax.random.PRNGKey(0)
    k1, k2, k3 = jax.random.split(key, 3)

    # Primary test: NCHW input, same convention as the PyTorch module.
    x = jax.random.normal(k1, (2, 4, 16, 16), dtype=jnp.float32) * 4.0
    out = jax.block_until_ready(h_sigmoid(x))
    ref = _h_sigmoid_ref(x)
    assert out.shape == x.shape
    assert out.dtype == x.dtype
    assert jnp.allclose(out, ref, atol=1e-6, rtol=1e-6)

    # Secondary test: odd size (exercises the rare pad/slice path) + bf16 dtype.
    y = (jax.random.normal(k2, (3, 5, 7), dtype=jnp.float32) * 4.0).astype(jnp.bfloat16)
    out_y = jax.block_until_ready(h_sigmoid(y))
    ref_y = _h_sigmoid_ref(y)
    assert out_y.shape == y.shape
    assert out_y.dtype == y.dtype
    assert jnp.allclose(out_y.astype(jnp.float32), ref_y.astype(jnp.float32),
                        atol=1e-2, rtol=1e-2)

    # Third test: model-sized activation (post-maxpool 64x56x56) -> multi-block,
    # exact-divisor (no pad), dual-TC split path.
    z = jax.random.normal(k3, (2, 64, 56, 56), dtype=jnp.float32) * 4.0
    out_z = jax.block_until_ready(h_sigmoid(z))
    ref_z = _h_sigmoid_ref(z)
    assert out_z.shape == z.shape
    assert jnp.allclose(out_z, ref_z, atol=1e-6, rtol=1e-6)

    print("KERNEL_OK")
</pallas_src>

<mosaic_0001>
module attributes {stable_mosaic.version = 11 : i64} {
  func.func @_h_sigmoid_kernel(%arg0: i32, %arg1: memref<8x256xf32, #tpu.memory_space<vmem>>, %arg2: memref<8x256xf32, #tpu.memory_space<vmem>>) attributes {dimension_semantics = [#tpu.dimension_semantics<parallel>], iteration_bounds = array<i64: 1>, scalar_prefetch = 0 : i64, scratch_operands = 0 : i64, tpu.core_type = #tpu.core_type<tc>, window_params = [{transform_indices = @transform_0, window_bounds = array<i64: 8, 256>}, {transform_indices = @transform_1, window_bounds = array<i64: 8, 256>}]} {
    %c0 = arith.constant 0 : index
    %c0_0 = arith.constant 0 : index
    %0 = vector.load %arg1[%c0, %c0_0] : memref<8x256xf32, #tpu.memory_space<vmem>>, vector<8x256xf32>
    %cst = arith.constant 3.000000e+00 : f32
    %1 = vector.broadcast %cst : f32 to vector<8x256xf32>
    %2 = arith.addf %0, %1 : vector<8x256xf32>
    %cst_1 = arith.constant 0.000000e+00 : f32
    %cst_2 = arith.constant 6.000000e+00 : f32
    %3 = vector.broadcast %cst_1 : f32 to vector<8x256xf32>
    %4 = arith.maximumf %3, %2 : vector<8x256xf32>
    %5 = vector.broadcast %cst_2 : f32 to vector<8x256xf32>
    %6 = arith.minimumf %5, %4 : vector<8x256xf32>
    %cst_3 = arith.constant 0.166666672 : f32
    %7 = vector.broadcast %cst_3 : f32 to vector<8x256xf32>
    %8 = arith.mulf %6, %7 : vector<8x256xf32>
    %c0_4 = arith.constant 0 : index
    %c0_5 = arith.constant 0 : index
    %9 = vector.load %arg2[%c0_4, %c0_5] : memref<8x256xf32, #tpu.memory_space<vmem>>, vector<8x256xf32>
    tpu.vector_store %arg2[%c0_4, %c0_5], %8 {strides = array<i32>} : memref<8x256xf32, #tpu.memory_space<vmem>>, vector<8x256xf32>,
    return
  }
  func.func @transform_0(%arg0: i32) -> (i32, i32) {
    %c0_i32 = arith.constant 0 : i32
    %c0_i32_0 = arith.constant 0 : i32
    return %arg0, %c0_i32 : i32, i32
  }
  func.func @transform_1(%arg0: i32) -> (i32, i32) {
    %c0_i32 = arith.constant 0 : i32
    %c0_i32_0 = arith.constant 0 : i32
    return %arg0, %c0_i32 : i32, i32
  }
}

</mosaic_0001>

<llo_original>
// kernel: tpu_custom_call.1
$region0: #{tpu_custom_call.1}
  #allocation0 [shape = 'u32[]', space=smem, size = 0x4, offset = 0x4, fixed_abs, tag = 'smem constant byte address 0x4 - core index']
  #allocation1 [shape = 'u32[72,128]{1,0:T(1,128)}', space=vmem, size = 0x9000, scoped, tag = 'internal scratch']
  %s0 = inlined_call_operand.hbm [shape: f32[8,256], index: 0, kind: input, shape index: {}]
  %s1 = inlined_call_operand.hbm [shape: f32[8,256], index: 1, kind: output, shape index: {}]
  %s2 = sld [smem:[#allocation0]]
  $region18: #{tpu_custom_call.1} parent=0
    _
  %s4 = ssub.s32 1, %s2
  %s5 = scalar_select 0, %s4, %s2
  $region1: #{tpu_custom_call.1} parent=0
    #allocation2 [shape = 'u8[8192]{0}', space=vmem, size = 0x2000, scoped, tag = 'input window, operand 0, single buffered']
    #allocation3 [shape = 's32[1]{0}', space=sflag, size = 0x4, scoped, tag = 'scoped memory for tpu_custom_call.1']
    #allocation4 [shape = 's32[1]{0}', space=sflag, size = 0x4, scoped, tag = 'scoped memory for tpu_custom_call.1']
    #allocation5 [shape = 'u8[8192]{0}', space=vmem, size = 0x2000, scoped, tag = 'output window, operand 0, single buffered']
    %6 = vsyncpa [#allocation3], 0
    %7 = vsyncpa [#allocation4], 0
    // Predicated region
    $region2: #{tpu_custom_call.1} parent=1 // pred_check
      _
    $region3: #{tpu_custom_call.1} parent=1 // pred_check_branch
      %9 = sbr.rel (0) target = $region5
    $region4: #{tpu_custom_call.1} parent=1 // pred_region
      %11 = vsyncadd [#allocation3], 0
      %s13 = sshll.u32 %s0, 4
      %s14 = int_to_ptr.hbm [resolvable:$true] %s13
      %s15 = sshll.u32 [#allocation2], 4
      %s16 = int_to_ptr.vmem [resolvable:$true] %s15
      %18 = dma.hbm_to_vmem [thread:$0]  %s14, 256, %s16, [#allocation3]
    $region5: #{tpu_custom_call.1} parent=1 // pred_fallthru
      _
    // Predicated region
    $region6: #{tpu_custom_call.1} parent=1 // pred_check
      _
    $region7: #{tpu_custom_call.1} parent=1 // pred_check_branch
      %20 = sbr.rel (0) target = $region9
    $region8: #{tpu_custom_call.1} parent=1 // pred_region
      %22 = dma.done [#allocation3], 256
    $region9: #{tpu_custom_call.1} parent=1 // pred_fallthru
      _
    %v23 = vld [vmem:[#allocation2] sm:$0xff]
    %v24 = vld [vmem:[#allocation2 + $0x8] sm:$0xff]
    %v25 = vadd.f32 %v23, 3.0
    %v26 = vadd.f32 %v24, 3.0
    %v27 = vmax.f32 %v25, 0.0
    %v28 = vmax.f32 %v26, 0.0
    %v29 = vmin.f32 %v27, 6.0
    %v30 = vmin.f32 %v28, 6.0
    %v31 = vmul.f32 %v29, 0.16666667
    %v32 = vmul.f32 %v30, 0.16666667
    %33 = vst [vmem:[#allocation5] sm:$0xff] %v31
    %34 = vst [vmem:[#allocation5 + $0x8] sm:$0xff] %v32
    // Predicated region
    $region10: #{tpu_custom_call.1} parent=1 // pred_check
      _
    $region11: #{tpu_custom_call.1} parent=1 // pred_check_branch
      %36 = sbr.rel (0) target = $region13
    $region12: #{tpu_custom_call.1} parent=1 // pred_region
      %38 = vsyncadd [#allocation4], 0
      %s40 = sshll.u32 [#allocation5], 4
      %s41 = int_to_ptr.vmem [resolvable:$true] %s40
      %s42 = sshll.u32 %s1, 4
      %s43 = int_to_ptr.hbm [resolvable:$true] %s42
      %45 = dma.vmem_to_hbm [thread:$0]  %s41, 256, %s43, [#allocation4]
    $region13: #{tpu_custom_call.1} parent=1 // pred_fallthru
      _
    // Predicated region
    $region14: #{tpu_custom_call.1} parent=1 // pred_check
      _
    $region15: #{tpu_custom_call.1} parent=1 // pred_check_branch
      %47 = sbr.rel (0) target = $region17
    $region16: #{tpu_custom_call.1} parent=1 // pred_region
      %49 = dma.done [#allocation4], 256
    $region17: #{tpu_custom_call.1} parent=1 // pred_fallthru
      _
    %50 = vsyncpa [#allocation3], 1
    %51 = vsyncpa [#allocation4], 1

</llo_original>
